<compile_context>
chip_gen: v6e
topology: v6e:2x2x1
jax: 0.10.0
libtpu: 0.0.40
codegen_flags: <defaults>
</compile_context>

<pallas_src>
import functools

import jax
import jax.numpy as jnp
from jax.experimental import pallas as pl
from jax.experimental.pallas import tpu as pltpu


def _round_up(x, m):
    return ((x + m - 1) // m) * m


# ----------------------------------------------------------------------------
# Pallas kernel 1: tiled GEMM + bias (+ optional ReLU), bf16 MXU / f32 accum
# ----------------------------------------------------------------------------
def _gemm_bias_single_kernel(x_ref, w_ref, b_ref, o_ref, *, act):
    # Single K tile: no accumulator scratch needed.
    out = jnp.dot(x_ref[...], w_ref[...],
                  preferred_element_type=jnp.float32) + b_ref[...]
    if act == "relu":
        out = jnp.maximum(out, 0.0)
    o_ref[...] = out.astype(o_ref.dtype)


def _gemm_bias_multi_kernel(x_ref, w_ref, b_ref, o_ref, acc_ref, *, act, nk):
    k = pl.program_id(2)
    prod = jnp.dot(x_ref[...], w_ref[...], preferred_element_type=jnp.float32)

    @pl.when(k == 0)
    def _():
        acc_ref[...] = prod          # no explicit zero-init store

    @pl.when(k > 0)
    def _():
        acc_ref[...] += prod

    @pl.when(k == nk - 1)
    def _():
        out = acc_ref[...] + b_ref[...]   # bias add + activation kept in f32
        if act == "relu":
            out = jnp.maximum(out, 0.0)
        o_ref[...] = out.astype(o_ref.dtype)


def _kn_tiling(K, N):
    """Tile sizes / padded extents for the K and N axes (independent of M)."""
    tn = min(512, _round_up(N, 128))
    tk = _round_up(K, 16) if K <= 256 else 512   # small K -> single unpadded tile
    return tk, tn, _round_up(K, tk), _round_up(N, tn)


def pack_linear(w, b):
    """w: (K, N) f32, b: (N,)/(1,N) -> persistently padded bf16 weight + f32 bias."""
    K, N = w.shape
    _, _, Kp, Np = _kn_tiling(K, N)
    wp = jnp.pad(w, ((0, Kp - K), (0, Np - N))).astype(jnp.bfloat16)
    bp = jnp.pad(jnp.asarray(b, jnp.float32).reshape(1, N), ((0, 0), (0, Np - N)))
    return {"w": wp, "b": bp, "k": K, "n": N}


def gemm_bias_act(x, lin, act="none", out_dtype=jnp.float32):
    """x: (M, K), lin: pack_linear dict -> (M, N) of out_dtype (tiled Pallas GEMM)."""
    M, K = x.shape
    assert K == lin["k"]
    N = lin["n"]
    tk, tn, Kp, Np = _kn_tiling(K, N)
    tm = min(512, _round_up(M, 16))
    Mp = _round_up(M, tm)

    xp = x.astype(jnp.bfloat16)                       # bf16 DMA for every tile
    if (Mp, Kp) != (M, K):
        xp = jnp.pad(xp, ((0, Mp - M), (0, Kp - K)))

    nk = Kp // tk
    grid = (Mp // tm, Np // tn, nk)
    if nk == 1:
        kernel = functools.partial(_gemm_bias_single_kernel, act=act)
        scratch = []
    else:
        kernel = functools.partial(_gemm_bias_multi_kernel, act=act, nk=nk)
        scratch = [pltpu.VMEM((tm, tn), jnp.float32)]

    out = pl.pallas_call(
        kernel,
        out_shape=jax.ShapeDtypeStruct((Mp, Np), out_dtype),
        grid=grid,
        in_specs=[
            pl.BlockSpec((tm, tk), lambda i, j, k: (i, k)),
            pl.BlockSpec((tk, tn), lambda i, j, k: (k, j)),
            pl.BlockSpec((1, tn), lambda i, j, k: (0, j)),
        ],
        out_specs=pl.BlockSpec((tm, tn), lambda i, j, k: (i, j)),
        scratch_shapes=scratch,
        compiler_params=pltpu.CompilerParams(
            dimension_semantics=("parallel", "parallel", "arbitrary")),
    )(xp, lin["w"], lin["b"])
    if (Mp, Np) != (M, N):
        out = out[:M, :N]
    return out


# ----------------------------------------------------------------------------
# Pallas kernel 2: GRU recurrence
#   grid = (batch chunks "parallel", time chunks "arbitrary"),
#   h state persistent in VMEM scratch, time chunks pipelined by BlockSpec,
#   bf16 xproj / w_hh, f32 gate math and h.
# ----------------------------------------------------------------------------
def _gru_kernel(xproj_ref, whh_ref, bhh_ref, c_ref, h_ref, *, hidden_pad, tc):
    Hp = hidden_pad

    @pl.when(pl.program_id(1) == 0)          # new batch chunk -> reset hidden state
    def _():
        h_ref[...] = jnp.zeros_like(h_ref)

    whh = whh_ref[...]                        # (Hp, 3Hp) bf16, resident across grid
    bhh = bhh_ref[...]                        # (1, 3Hp) f32

    def step(t, carry):
        h = h_ref[...]                                            # (Bc, Hp) f32
        gx = xproj_ref[t].astype(jnp.float32)                     # (Bc, 3Hp)
        gh = jnp.dot(h.astype(jnp.bfloat16), whh,
                     preferred_element_type=jnp.float32) + bhh
        # PyTorch GRU gate order: r, z, n (gate math kept in f32)
        r = jax.nn.sigmoid(gx[:, 0:Hp] + gh[:, 0:Hp])
        zg = jax.nn.sigmoid(gx[:, Hp:2 * Hp] + gh[:, Hp:2 * Hp])
        n = jnp.tanh(gx[:, 2 * Hp:3 * Hp] + r * gh[:, 2 * Hp:3 * Hp])
        h_new = (1.0 - zg) * n + zg * h
        h_ref[...] = h_new
        c_ref[t] = h_new.astype(c_ref.dtype)
        return carry

    # unroll=2: overlap step t+1's MXU push with step t's VPU/EUP gate math.
    jax.lax.fori_loop(0, tc, step, 0, unroll=2)


def gru_forward(xproj, whh, bhh, *, hidden_pad, tc, bc):
    """xproj: (Tp, Bp, 3*Hp) bf16 input gates -> (Tp, Bp, Hp) f32 hidden states."""
    Tp, Bp, _ = xproj.shape
    Hp = hidden_pad
    nb, nt = Bp // bc, Tp // tc
    # VMEM per step ~ 2*(tc*bc*3Hp*2B) + 2*(tc*bc*Hp*4B) + Hp*3Hp*2B; with tc<=128,
    # bc=16 this stays well under the 32 MiB scoped default (and v7x's 64 MiB).
    return pl.pallas_call(
        functools.partial(_gru_kernel, hidden_pad=Hp, tc=tc),
        out_shape=jax.ShapeDtypeStruct((Tp, Bp, Hp), jnp.float32),
        grid=(nb, nt),
        in_specs=[
            pl.BlockSpec((tc, bc, 3 * Hp), lambda b, t: (t, b, 0)),
            pl.BlockSpec((Hp, 3 * Hp), lambda b, t: (0, 0)),
            pl.BlockSpec((1, 3 * Hp), lambda b, t: (0, 0)),
        ],
        out_specs=pl.BlockSpec((tc, bc, Hp), lambda b, t: (t, b, 0)),
        scratch_shapes=[pltpu.VMEM((bc, Hp), jnp.float32)],
        compiler_params=pltpu.CompilerParams(
            dimension_semantics=("parallel", "arbitrary")),
    )(xproj, whh, bhh)


def _pack_gru_gates(w, hidden, hidden_pad):
    """PyTorch (3H, D) gate-stacked weight -> (D, 3*H_pad): transposed for h @ W
    and zero-padded per gate so each gate block is a 128-lane multiple."""
    H, Hp = hidden, hidden_pad
    D = w.shape[1]
    wg = w.reshape(3, H, D).transpose(0, 2, 1)          # (gate, in, out)
    wg = jnp.pad(wg, ((0, 0), (0, 0), (0, Hp - H)))     # (gate, in, out_pad)
    return wg.transpose(1, 0, 2).reshape(D, 3 * Hp)     # (in, 3*H_pad)


def _pack_gru_bias(b, hidden, hidden_pad):
    H, Hp = hidden, hidden_pad
    return jnp.pad(b.reshape(3, H), ((0, 0), (0, Hp - H))).reshape(1, 3 * Hp)


def autoregressor_forward(z, gru):
    """z: (B, T, genc_hidden) -> c: (B, T, gar_hidden) (batch_first GRU output)."""
    B, T, G = z.shape
    H, Hp = gru["hidden"], gru["hidden_pad"]
    Bp = _round_up(B, 16)                 # 16-row sublane pack for bf16 h @ W_hh
    tc = min(128, T)
    Tp = _round_up(T, tc)

    # Time-major z BEFORE the projection GEMM: the GEMM output is already the
    # (Tp, Bp, 3Hp) layout the GRU consumes (no HBM transpose of xproj).
    z_tb = jnp.transpose(z, (1, 0, 2))                               # (T, B, G)
    z_tb = jnp.pad(z_tb, ((0, Tp - T), (0, Bp - B), (0, 0)))
    xproj = gemm_bias_act(z_tb.reshape(Tp * Bp, G), gru["ih"],
                          out_dtype=jnp.bfloat16)                    # (Tp*Bp, 3Hp)
    xproj = xproj.reshape(Tp, Bp, 3 * Hp)

    c_tb = gru_forward(xproj, gru["whh"], gru["bhh"],
                       hidden_pad=Hp, tc=tc, bc=16)                  # (Tp, Bp, Hp)
    return jnp.transpose(c_tb, (1, 0, 2))[:B, :T, :H]                # (B, T, H)


# ----------------------------------------------------------------------------
# Pallas kernel 3: InfoNCE (one batched contrastive contraction + log-softmax,
# scalar outputs in SMEM; masking / softmax kept in f32)
# ----------------------------------------------------------------------------
def _infonce_kernel(enc_ref, pred_ref, nce_ref, correct_ref, *, k_steps, batch):
    Kp, Bp, _ = enc_ref.shape
    # total[k, b1, b2] = <z_{b1, t+k+1}, Wk(c_{b2, t})> -- one batched MXU contraction
    total = jax.lax.dot_general(
        enc_ref[...], pred_ref[...],
        dimension_numbers=(((2,), (2,)), ((0,), (0,))),
        preferred_element_type=jnp.float32)                          # (K, Bp, Bp)

    row = jax.lax.broadcasted_iota(jnp.int32, (Kp, Bp, Bp), 1)
    col = jax.lax.broadcasted_iota(jnp.int32, (Kp, Bp, Bp), 2)
    valid = (row < batch) & (col < batch)
    total = jnp.where(valid, total, jnp.float32(-1e30))              # mask batch padding

    # log-softmax over dim=1 of each per-step (B, B) matrix, sum of the diagonal.
    # TODO(synk): reference InfoNCE softmax axis assumed to be the negatives axis (dim=1).
    m = jnp.max(total, axis=2, keepdims=True)
    lse = jnp.log(jnp.sum(jnp.exp(total - m), axis=2, keepdims=True)) + m
    logsm = total - lse
    diag = (row == col) & (row < batch)
    nce_ref[0, 0] = jnp.sum(jnp.where(diag, logsm, 0.0))

    # accuracy: column-wise argmax (dim=0) hits the diagonal; last prediction step
    # only (the reference loop reassigns `correct` each k); first-index tie-break
    # matches torch.argmax.
    tk = total[k_steps - 1]                                          # (Bp, Bp)
    r2 = jax.lax.broadcasted_iota(jnp.int32, (Bp, Bp), 0)
    c2 = jax.lax.broadcasted_iota(jnp.int32, (Bp, Bp), 1)
    col_max = jnp.max(tk, axis=0, keepdims=True)                     # (1, Bp)
    argmax_row = jnp.min(
        jnp.where(tk == col_max, r2.astype(jnp.float32), jnp.float32(Bp)),
        axis=0, keepdims=True)                                       # (1, Bp)
    col_ids = c2[0:1, :]
    hit = (argmax_row == col_ids.astype(jnp.float32)) & (col_ids < batch)
    correct_ref[0, 0] = jnp.sum(hit.astype(jnp.float32))


def infonce_scores(enc, pred, batch):
    """enc, pred: (K, B, G) f32. Returns (nce_sum, correct_last) each shaped (1, 1)."""
    K, B, G = enc.shape
    Bp, Gp = _round_up(B, 8), _round_up(G, 128)
    pad = ((0, 0), (0, Bp - B), (0, Gp - G))
    encp = jnp.pad(enc, pad) if (Bp, Gp) != (B, G) else enc
    predp = jnp.pad(pred, pad) if (Bp, Gp) != (B, G) else pred
    return pl.pallas_call(
        functools.partial(_infonce_kernel, k_steps=K, batch=batch),
        out_shape=(jax.ShapeDtypeStruct((1, 1), jnp.float32),
                   jax.ShapeDtypeStruct((1, 1), jnp.float32)),
        in_specs=[pl.BlockSpec(memory_space=pltpu.MemorySpace.VMEM),
                  pl.BlockSpec(memory_space=pltpu.MemorySpace.VMEM)],
        out_specs=(pl.BlockSpec(memory_space=pltpu.MemorySpace.SMEM),
                   pl.BlockSpec(memory_space=pltpu.MemorySpace.SMEM)),
    )(encp, predp)


# ----------------------------------------------------------------------------
# JAX glue: im2col conv (B,L,C layout), parameter init / one-time packing,
# full CPC forward
# ----------------------------------------------------------------------------
def conv1d_act(x_blc, lin, ksz, stride, padding, act="relu", out_dtype=jnp.float32):
    """x_blc: (B, L, C_in), lin packs w as (ksz*C_in, C_out) -> (B, L_out, C_out)."""
    B, L, C_in = x_blc.shape
    x_pad = jnp.pad(x_blc, ((0, 0), (padding, padding), (0, 0)))
    L_out = (L + 2 * padding - ksz) // stride + 1
    # TODO(synk): im2col gather is XLA glue; a fused ksz-tap shifted-matmul conv
    # kernel would remove this HBM intermediate entirely.
    idx = jnp.arange(L_out)[:, None] * stride + jnp.arange(ksz)[None, :]   # (L_out, ksz)
    cols = x_pad[:, idx, :]                                                # (B, L_out, ksz, C_in)
    cols = cols.reshape(B * L_out, ksz * C_in)
    out = gemm_bias_act(cols, lin, act=act, out_dtype=out_dtype)           # Pallas GEMM
    return out.reshape(B, L_out, lin["n"])


def init_params(key, genc_input, genc_hidden, gar_hidden, filter_sizes, prediction_step):
    keys = jax.random.split(key, 16)
    scale = 0.1
    params = {}

    # Encoder: Conv1d(+ReLU) stack, all hidden channels = genc_hidden.
    convs = []
    c_in = genc_input
    for li, ksz in enumerate(filter_sizes):
        w = scale * jax.random.normal(keys[li], (genc_hidden, c_in, ksz), jnp.float32)
        b = scale * jax.random.normal(keys[li + 4], (genc_hidden,), jnp.float32)
        convs.append((w, b))
        c_in = genc_hidden
    params["convs"] = convs

    # Autoregressor: single-layer GRU (input genc_hidden, hidden gar_hidden).
    H = gar_hidden
    params["w_ih"] = scale * jax.random.normal(keys[8], (3 * H, genc_hidden), jnp.float32)
    params["w_hh"] = scale * jax.random.normal(keys[9], (3 * H, H), jnp.float32)
    params["b_ih"] = scale * jax.random.normal(keys[10], (3 * H,), jnp.float32)
    params["b_hh"] = scale * jax.random.normal(keys[11], (3 * H,), jnp.float32)

    # InfoNCE: K prediction heads Wk: Linear(gar_hidden -> genc_hidden).
    params["wk"] = scale * jax.random.normal(
        keys[12], (prediction_step, genc_hidden, gar_hidden), jnp.float32)
    params["bk"] = scale * jax.random.normal(
        keys[13], (prediction_step, genc_hidden), jnp.float32)
    return params


def pack_params(params, genc_hidden, gar_hidden, prediction_step):
    """One-time weight padding / gate packing / bf16 casts (hoisted off the forward path)."""
    packed = {"k": prediction_step, "genc": genc_hidden}

    convs = []
    for (w, b) in params["convs"]:
        C_out, C_in, ksz = w.shape
        w2 = w.transpose(2, 1, 0).reshape(ksz * C_in, C_out)   # matches (k, c) im2col order
        convs.append((pack_linear(w2, b), ksz))
    packed["convs"] = convs

    H = gar_hidden
    Hp = _round_up(H, 128)
    packed["gru"] = {
        "hidden": H,
        "hidden_pad": Hp,
        "ih": pack_linear(_pack_gru_gates(params["w_ih"], H, Hp),
                          _pack_gru_bias(params["b_ih"], H, Hp)),
        "whh": jnp.pad(_pack_gru_gates(params["w_hh"], H, Hp),
                       ((0, Hp - H), (0, 0))).astype(jnp.bfloat16),
        "bhh": _pack_gru_bias(params["b_hh"], H, Hp),
    }

    wk_all = jnp.transpose(params["wk"], (2, 0, 1)).reshape(gar_hidden,
                                                            prediction_step * genc_hidden)
    bk_all = params["bk"].reshape(1, prediction_step * genc_hidden)
    packed["wk"] = pack_linear(wk_all, bk_all)
    return packed


def cpc_forward(x, packed, strides, padding, t_sample):
    B = x.shape[0]
    K = packed["k"]
    G = packed["genc"]

    # ---------------- Encoder ----------------
    # Activations stay in (B, L, C); intermediate layers in bf16, last in f32
    # (z is a module output and feeds InfoNCE).
    h = jnp.transpose(x, (0, 2, 1))                                  # (B, L, C_in)
    n_layers = len(packed["convs"])
    for li, ((lin, ksz), s, p) in enumerate(zip(packed["convs"], strides, padding)):
        last = li == n_layers - 1
        h = conv1d_act(h, lin, ksz, stride=s, padding=p, act="relu",
                       out_dtype=jnp.float32 if last else jnp.bfloat16)
    z = h                                                            # (B, T, genc_hidden)
    _, T, _ = z.shape

    # ---------------- Autoregressor (GRU) ----------------
    c = autoregressor_forward(z, packed["gru"])                      # (B, T, gar_hidden)
    # TODO(synk): module docstring claims c is (B, hidden, seq); batch_first GRU
    # output is (B, seq, hidden), which is what downstream InfoNCE consumes.

    # ---------------- InfoNCE ----------------
    enc = jnp.transpose(z[:, t_sample + 1:t_sample + 1 + K, :], (1, 0, 2))  # (K, B, G)
    c_t = c[:, t_sample, :]                                                 # (B, gar)
    pred_flat = gemm_bias_act(c_t, packed["wk"])                            # (B, K*G)
    pred = pred_flat.reshape(B, K, G).transpose(1, 0, 2)                    # (K, B, G)

    nce_sum, correct = infonce_scores(enc, pred, batch=B)
    loss = -nce_sum[0, 0] / (B * K)
    accuracy = correct[0, 0] / B
    return loss, accuracy, z, c


if __name__ == "__main__":
    # Small, consistent config (CPC-style but shrunk):
    B, genc_input, L = 2, 4, 64
    genc_hidden, gar_hidden = 32, 32
    strides = (2, 2)
    filter_sizes = (4, 4)
    padding = (1, 1)
    prediction_step = 3        # args.prediction_step

    key = jax.random.PRNGKey(0)
    kx, kp, kt = jax.random.split(key, 3)
    x = jax.random.normal(kx, (B, genc_input, L), jnp.float32)
    params = init_params(kp, genc_input, genc_hidden, gar_hidden,
                         filter_sizes, prediction_step)
    packed = pack_params(params, genc_hidden, gar_hidden, prediction_step)
    jax.block_until_ready(packed)

    # Deterministic random time step t (host-side, like torch.randint in reference).
    T = L
    for s, p, f in zip(strides, padding, filter_sizes):
        T = (T + 2 * p - f) // s + 1
    t_sample = int(jax.random.randint(kt, (), 0, T - prediction_step))

    loss, accuracy, z, c = cpc_forward(x, packed, strides, padding, t_sample)
    jax.block_until_ready((loss, accuracy, z, c))
    assert z.shape == (B, T, genc_hidden)
    assert c.shape == (B, T, gar_hidden)
    print("KERNEL_OK")
</pallas_src>

<mosaic_0001>
module attributes {stable_mosaic.version = 11 : i64} {
  func.func @_gemm_bias_single_kernel(%arg0: i32, %arg1: i32, %arg2: i32, %arg3: memref<64x16xbf16, #tpu.memory_space<vmem>>, %arg4: memref<16x128xbf16, #tpu.memory_space<vmem>>, %arg5: memref<1x128xf32, #tpu.memory_space<vmem>>, %arg6: memref<64x128xbf16, #tpu.memory_space<vmem>>) attributes {dimension_semantics = [#tpu.dimension_semantics<parallel>, #tpu.dimension_semantics<parallel>, #tpu.dimension_semantics<arbitrary>], iteration_bounds = array<i64: 1, 1, 1>, scalar_prefetch = 0 : i64, scratch_operands = 0 : i64, tpu.core_type = #tpu.core_type<tc>, window_params = [{transform_indices = @transform_0, window_bounds = array<i64: 64, 16>}, {transform_indices = @transform_1, window_bounds = array<i64: 16, 128>}, {transform_indices = @transform_2, window_bounds = array<i64: 1, 128>}, {transform_indices = @transform_3, window_bounds = array<i64: 64, 128>}]} {
    %c0 = arith.constant 0 : index
    %c0_0 = arith.constant 0 : index
    %0 = vector.load %arg3[%c0, %c0_0] : memref<64x16xbf16, #tpu.memory_space<vmem>>, vector<64x16xbf16>
    %c0_1 = arith.constant 0 : index
    %c0_2 = arith.constant 0 : index
    %1 = vector.load %arg4[%c0_1, %c0_2] : memref<16x128xbf16, #tpu.memory_space<vmem>>, vector<16x128xbf16>
    %cst = arith.constant dense<0.000000e+00> : vector<64x128xf32>
    %2 = tpu.matmul %0, %1, %cst {dimension_numbers = #tpu.dot_dimension_numbers<[1], [0], [0], [1], [0, 0, 1, 1], [], []>} : vector<64x16xbf16>, vector<16x128xbf16>, vector<64x128xf32> -> vector<64x128xf32>
    %c0_3 = arith.constant 0 : index
    %c0_4 = arith.constant 0 : index
    %3 = vector.load %arg5[%c0_3, %c0_4] : memref<1x128xf32, #tpu.memory_space<vmem>>, vector<1x128xf32>
    %4 = vector.broadcast %3 : vector<1x128xf32> to vector<64x128xf32>
    %5 = arith.addf %2, %4 : vector<64x128xf32>
    %cst_5 = arith.constant 0.000000e+00 : f32
    %6 = vector.broadcast %cst_5 : f32 to vector<64x128xf32>
    %7 = arith.maximumf %5, %6 : vector<64x128xf32>
    %8 = arith.truncf %7 : vector<64x128xf32> to vector<64x128xbf16>
    %c0_6 = arith.constant 0 : index
    %c0_7 = arith.constant 0 : index
    %9 = vector.load %arg6[%c0_6, %c0_7] : memref<64x128xbf16, #tpu.memory_space<vmem>>, vector<64x128xbf16>
    tpu.vector_store %arg6[%c0_6, %c0_7], %8 {strides = array<i32>} : memref<64x128xbf16, #tpu.memory_space<vmem>>, vector<64x128xbf16>,
    return
  }
  func.func @transform_0(%arg0: i32, %arg1: i32, %arg2: i32) -> (i32, i32) {
    %c0_i32 = arith.constant 0 : i32
    return %arg0, %arg2 : i32, i32
  }
  func.func @transform_1(%arg0: i32, %arg1: i32, %arg2: i32) -> (i32, i32) {
    %c0_i32 = arith.constant 0 : i32
    return %arg2, %arg1 : i32, i32
  }
  func.func @transform_2(%arg0: i32, %arg1: i32, %arg2: i32) -> (i32, i32) {
    %c0_i32 = arith.constant 0 : i32
    %c0_i32_0 = arith.constant 0 : i32
    return %c0_i32, %arg1 : i32, i32
  }
  func.func @transform_3(%arg0: i32, %arg1: i32, %arg2: i32) -> (i32, i32) {
    %c0_i32 = arith.constant 0 : i32
    return %arg0, %arg1 : i32, i32
  }
}

</mosaic_0001>

<llo_original>
// kernel: tpu_custom_call.1
$region0: #{tpu_custom_call.1}
  #allocation0 [shape = 'u32[]', space=smem, size = 0x4, offset = 0x4, fixed_abs, tag = 'smem constant byte address 0x4 - core index']
  #allocation1 [shape = 'u32[144,128]{1,0:T(1,128)}', space=vmem, size = 0x12000, scoped, tag = 'internal scratch']
  %s0 = inlined_call_operand.vmem [shape: bf16[64,16], index: 0, kind: input, shape index: {}]
  %s1 = inlined_call_operand.vmem [shape: bf16[16,128], index: 1, kind: input, shape index: {}]
  %s2 = inlined_call_operand.vmem [shape: f32[1,128], index: 2, kind: input, shape index: {}]
  %s3 = inlined_call_operand.hbm [shape: bf16[64,128], index: 3, kind: output, shape index: {}]
  %s4 = sld [smem:[#allocation0]]
  $region22: #{tpu_custom_call.1} parent=0
    _
  %s6 = ssub.s32 1, %s4
  %s7 = scalar_select 0, %s6, %s4
  $region1: #{tpu_custom_call.1} parent=0
    #allocation2 [shape = 'u8[16384]{0}', space=vmem, size = 0x4000, scoped, tag = 'output window, operand 0, single buffered']
    #allocation3 [shape = 's32[1]{0}', space=sflag, size = 0x4, scoped, tag = 'scoped memory for tpu_custom_call.1']
    %8 = vsyncpa [#allocation3], 0
    // Predicated region
    $region2: #{tpu_custom_call.1} parent=1 // pred_check
      _
    $region3: #{tpu_custom_call.1} parent=1 // pred_check_branch
      %10 = sbr.rel (0) target = $region5
    $region4: #{tpu_custom_call.1} parent=1 // pred_region
      _
    $region5: #{tpu_custom_call.1} parent=1 // pred_fallthru
      _
    // Predicated region
    $region6: #{tpu_custom_call.1} parent=1 // pred_check
      _
    $region7: #{tpu_custom_call.1} parent=1 // pred_check_branch
      %12 = sbr.rel (0) target = $region9
    $region8: #{tpu_custom_call.1} parent=1 // pred_region
      _
    $region9: #{tpu_custom_call.1} parent=1 // pred_fallthru
      _
    // Predicated region
    $region10: #{tpu_custom_call.1} parent=1 // pred_check
      _
    $region11: #{tpu_custom_call.1} parent=1 // pred_check_branch
      %14 = sbr.rel (0) target = $region13
    $region12: #{tpu_custom_call.1} parent=1 // pred_region
      _
    $region13: #{tpu_custom_call.1} parent=1 // pred_fallthru
      _
    %v16 = vld [vmem:[%s0] sm:$0xf]
    %v17 = vld [vmem:[%s0 + $0x4] sm:$0xf]
    %v18 = vld [vmem:[%s0 + $0x8] sm:$0xf]
    %v19 = vld [vmem:[%s0 + $0xc] sm:$0xf]
    %v20 = vld [vmem:[%s0 + $0x10] sm:$0xf]
    %v21 = vld [vmem:[%s0 + $0x14] sm:$0xf]
    %v22 = vld [vmem:[%s0 + $0x18] sm:$0xf]
    %v23 = vld [vmem:[%s0 + $0x1c] sm:$0xf]
    %v24 = vld [vmem:[%s1] sm:$0xf]
    %v25 = vld [vmem:[%s1 + $0x4] sm:$0xf]
    %v26 = vld [vmem:[%s2] sm:$0x1]
    %v28 = vlaneseq
    %v29 = vshrl.u32 %v28, 7
    %v30 = vsub.s32 0, %v29
    %v31 = vrot.slane %v26, %v30
    %v41 = vunpack.c.l.b16 %v16
    %v42 = vunpack.c.l.b16 %v17
    %v43 = vunpack.c.l.b16 %v18
    %v44 = vunpack.c.l.b16 %v19
    %v45 = vunpack.c.l.b16 %v20
    %v46 = vunpack.c.l.b16 %v21
    %v47 = vunpack.c.l.b16 %v22
    %v48 = vunpack.c.l.b16 %v23
    %v49 = vpack.c.b16 %v42, %v41
    %v50 = vpack.c.b16 %v44, %v43
    %v51 = vpack.c.b16 %v46, %v45
    %v52 = vpack.c.b16 %v48, %v47
    %v55 = vunpack.c.l.b16 %v24
    %v56 = vunpack.c.l.b16 %v25
    %v57 = vpack.c.b16 %v56, %v55
    %vm59 = vcmask 130048
    %v61 = vsel %vm59, %v49, 0
    %v64 = vsel %vm59, %v50, 0
    %v67 = vsel %vm59, %v51, 0
    %v70 = vsel %vm59, %v52, 0
    %72 = vmatprep.subr.bf16.mxu0 0
    %73 = vmatpush1.bf16.msra.mxu0 0
    %74 = vmatprep.subr.bf16.mxu0 0
    %75 = vmatpush1.bf16.msra.mxu0 0
    %76 = vmatprep.subr.bf16.mxu0 0
    %77 = vmatpush1.bf16.msra.mxu0 0
    %78 = vmatprep.subr.bf16.mxu0 0
    %79 = vmatpush1.bf16.msra.mxu0 0
    %80 = vmatprep.subr.bf16.mxu0 0
    %81 = vmatpush1.bf16.msra.mxu0 0
    %82 = vmatprep.subr.bf16.mxu0 0
    %83 = vmatpush1.bf16.msra.mxu0 0
    %84 = vmatprep.subr.bf16.mxu0 0
    %85 = vmatpush1.bf16.msra.mxu0 0
    %86 = vmatprep.subr.bf16.mxu0 0
    %87 = vmatpush1.bf16.msra.mxu0 %v57
    %88 = vmatprep.subr.bf16.mxu0 0
    %89 = vmatpush2.bf16.msra.mxu0 0
    %90 = vmatprep.subr.bf16.mxu0 0
    %91 = vmatpush2.bf16.msra.mxu0 0
    %92 = vmatprep.subr.bf16.mxu0 0
    %93 = vmatpush2.bf16.msra.mxu0 0
    %94 = vmatprep.subr.bf16.mxu0 0
    %95 = vmatpush2.bf16.msra.mxu0 0
    %96 = vmatprep.subr.bf16.mxu0 0
    %97 = vmatpush2.bf16.msra.mxu0 0
    %98 = vmatprep.subr.bf16.mxu0 0
    %99 = vmatpush2.bf16.msra.mxu0 0
    %100 = vmatprep.subr.bf16.mxu0 0
    %101 = vmatpush2.bf16.msra.mxu0 0
    %102 = vmatprep.subr.bf16.mxu0 0
    %103 = vmatpush2.bf16.msra.mxu0 0
    %104 = vmatprep.mubr.bf16.mxu0 0
    %105 = vmatmul.mubr.bf16.gmra.mxu0 %v61
    %v106 = vpop.f32.mrf.mxu0
    %v107 = vadd.f32 %v31, %v106
    %v108 = vpop.f32.mrf.mxu0
    %v109 = vpop.f32.mrf.mxu0
    %v110 = vadd.f32 %v31, %v109
    %v111 = vpop.f32.mrf.mxu0
    %112 = vmatprep.mubr.bf16.mxu0 0
    %113 = vmatmul.mubr.bf16.gmra.mxu0 %v64
    %v114 = vpop.f32.mrf.mxu0
    %v115 = vadd.f32 %v31, %v114
    %v116 = vpop.f32.mrf.mxu0
    %v117 = vpop.f32.mrf.mxu0
    %v118 = vadd.f32 %v31, %v117
    %v119 = vpop.f32.mrf.mxu0
    %120 = vmatprep.mubr.bf16.mxu0 0
    %121 = vmatmul.mubr.bf16.gmra.mxu0 %v67
    %v122 = vpop.f32.mrf.mxu0
    %v123 = vadd.f32 %v31, %v122
    %v124 = vpop.f32.mrf.mxu0
    %v125 = vpop.f32.mrf.mxu0
    %v126 = vadd.f32 %v31, %v125
    %v127 = vpop.f32.mrf.mxu0
    %128 = vmatprep.mubr.bf16.mxu0 0
    %129 = vmatmul.mubr.bf16.gmra.mxu0 %v70
    %v130 = vpop.f32.mrf.mxu0
    %v131 = vadd.f32 %v31, %v130
    %v132 = vpop.f32.mrf.mxu0
    %v133 = vpop.f32.mrf.mxu0
    %v134 = vadd.f32 %v31, %v133
    %v135 = vpop.f32.mrf.mxu0
    %136 = vdwg.mxu0
    %v137 = vmax.f32 %v107, 0.0
    %v138 = vmax.f32 %v110, 0.0
    %v139 = vmax.f32 %v115, 0.0
    %v140 = vmax.f32 %v118, 0.0
    %v141 = vmax.f32 %v123, 0.0
    %v142 = vmax.f32 %v126, 0.0
    %v143 = vmax.f32 %v131, 0.0
    %v144 = vmax.f32 %v134, 0.0
    %v145 = vpack.c.bf16 %v138, %v137
    %v146 = vpack.c.bf16 %v140, %v139
    %v147 = vpack.c.bf16 %v142, %v141
    %v148 = vpack.c.bf16 %v144, %v143
    %v153 = vunpack.c.l.b16 %v145
    %v154 = vunpack.c.h.b16 %v145
    %v155 = vunpack.c.l.b16 %v146
    %v156 = vunpack.c.h.b16 %v146
    %v157 = vunpack.c.l.b16 %v147
    %v158 = vunpack.c.h.b16 %v147
    %v159 = vunpack.c.l.b16 %v148
    %v160 = vunpack.c.h.b16 %v148
    %v161 = vpack.c.b16 %v153, %v153
    %v162 = vpack.c.b16 %v154, %v154
    %v163 = vpack.c.b16 %v155, %v155
    %v164 = vpack.c.b16 %v156, %v156
    %v165 = vpack.c.b16 %v157, %v157
    %v166 = vpack.c.b16 %v158, %v158
    %v167 = vpack.c.b16 %v159, %v159
    %v168 = vpack.c.b16 %v160, %v160
    %177 = vst [vmem:[#allocation2] sm:$0xf] %v161
    %178 = vst [vmem:[#allocation2 + $0x4] sm:$0xf] %v162
    %179 = vst [vmem:[#allocation2 + $0x8] sm:$0xf] %v163
    %180 = vst [vmem:[#allocation2 + $0xc] sm:$0xf] %v164
    %181 = vst [vmem:[#allocation2 + $0x10] sm:$0xf] %v165
    %182 = vst [vmem:[#allocation2 + $0x14] sm:$0xf] %v166
    %183 = vst [vmem:[#allocation2 + $0x18] sm:$0xf] %v167
    %184 = vst [vmem:[#allocation2 + $0x1c] sm:$0xf] %v168
    // Predicated region
    $region14: #{tpu_custom_call.1} parent=1 // pred_check
      _
    $region15: #{tpu_custom_call.1} parent=1 // pred_check_branch
      %186 = sbr.rel (0) target = $region17
    $region16: #{tpu_custom_call.1} parent=1 // pred_region
      %s188 = ssub.s32 512, 512
      %189 = vsyncadd [#allocation3], %s188
      %s190 = sshll.u32 [#allocation2], 4
      %s191 = int_to_ptr.vmem [resolvable:$true] %s190
      %196 = dma.vmem_to_hbm [thread:$0]  %s191, 512, %s3, [#allocation3], 64, 64, 4
    $region17: #{tpu_custom_call.1} parent=1 // pred_fallthru
      _
    // Predicated region
    $region18: #{tpu_custom_call.1} parent=1 // pred_check
      _
    $region19: #{tpu_custom_call.1} parent=1 // pred_check_branch
      %198 = sbr.rel (0) target = $region21
    $region20: #{tpu_custom_call.1} parent=1 // pred_region
      %199 = dma.done [#allocation3], 512
    $region21: #{tpu_custom_call.1} parent=1 // pred_fallthru
      _
    %200 = vsyncpa [#allocation3], 1

</llo_original>
